<compile_context>
chip_gen: v6e
topology: v6e:2x2x1
jax: 0.10.0
libtpu: 0.0.40
codegen_flags: <defaults>
</compile_context>

<pallas_src>
import functools

import jax
import jax.numpy as jnp
from jax.experimental import pallas as pl
from jax.experimental.pallas import tpu as pltpu

BETA = 0.5
THRESHOLD = 1.0


def _round_up(n: int, m: int) -> int:
    return ((n + m - 1) // m) * m


def _snn_kernel(x_ref, w1_ref, b1_ref, w2_ref, b2_ref, acc_ref):
    """Whole SNN forward in one straight-line invocation (no grid).

    x_ref:  (T*B, D)  time-major flattened input: row t*B + b == x[b, t, :]
    w1_ref: (D, Hp)   fc1 weight stored (in, out), lane-padded
    b1_ref: (1, Hp)
    w2_ref: (Hp, Op)  fc2 weight stored (in, out), lane-padded
    b2_ref: (1, Op)
    acc_ref:(B, Op)   per-sample spike counts over time (padded lanes stay 0)
    """
    TB = x_ref.shape[0]
    B, Op = acc_ref.shape
    Hp = w1_ref.shape[1]
    T = TB // B
    f32 = jnp.float32

    # ---- hoisted layer-1 matmul: ONE (T*B, D) @ (D, Hp) MXU op ----
    cur1_all = (
        jnp.dot(x_ref[...], w1_ref[...], preferred_element_type=f32) + b1_ref[...]
    )  # (T*B, Hp)

    # ---- layer-1 LIF recurrence: batch-vectorized, pure VPU work ----
    # reset_t == spk_{t-1} exactly (reset computed from the pre-update membrane),
    # so the previous spike doubles as the reset mask.
    mem1 = jnp.zeros((B, Hp), f32)
    spk1 = jnp.zeros((B, Hp), f32)
    spk1_rows = []
    for t in range(T):
        cur1 = cur1_all[t * B:(t + 1) * B, :]                 # contiguous rows
        mem1 = BETA * mem1 + cur1 - spk1 * THRESHOLD
        spk1 = (mem1 - THRESHOLD > 0.0).astype(f32)
        spk1_rows.append(spk1)
    spk1_all = jnp.concatenate(spk1_rows, axis=0)             # (T*B, Hp)

    # ---- hoisted layer-2 matmul: ONE (T*B, Hp) @ (Hp, Op) MXU op ----
    cur2_all = (
        jnp.dot(spk1_all, w2_ref[...], preferred_element_type=f32) + b2_ref[...]
    )  # (T*B, Op)

    # ---- layer-2 LIF recurrence + spike accumulation ----
    mem2 = jnp.zeros((B, Op), f32)
    spk2 = jnp.zeros((B, Op), f32)
    acc = jnp.zeros((B, Op), f32)
    for t in range(T):
        cur2 = cur2_all[t * B:(t + 1) * B, :]
        mem2 = BETA * mem2 + cur2 - spk2 * THRESHOLD
        spk2 = (mem2 - THRESHOLD > 0.0).astype(f32)
        acc = acc + spk2

    acc_ref[...] = acc                                        # single lane-dense store


def pad_params(w1_dh, b1_h, w2_ho, b2_o):
    """One-time (model-load) padding to 128-lane-dense shapes.

    Padded hidden/output units get zero weight & bias, so they receive zero current,
    never cross threshold and never spike -> results match the unpadded math.
    """
    D, H = w1_dh.shape
    O = w2_ho.shape[1]
    Hp = _round_up(H, 128)
    Op = _round_up(O, 128)
    f32 = jnp.float32
    w1p = jnp.zeros((D, Hp), f32).at[:, :H].set(w1_dh.astype(f32))
    b1p = jnp.zeros((1, Hp), f32).at[0, :H].set(b1_h.astype(f32))
    w2p = jnp.zeros((Hp, Op), f32).at[:H, :O].set(w2_ho.astype(f32))
    b2p = jnp.zeros((1, Op), f32).at[0, :O].set(b2_o.astype(f32))
    return w1p, b1p, w2p, b2p


@functools.partial(jax.jit, static_argnames=("num_outputs",))
def leaky_two_layer_forward(x_btd, w1p, b1p, w2p, b2p, *, num_outputs):
    """x_btd: (B, T, D) float32 (PyTorch batch-first). Returns (B, num_outputs) softmax probs."""
    B, T, D = x_btd.shape
    Op = w2p.shape[1]
    f32 = jnp.float32

    # Time-major layout: each step's batch rows become contiguous, aligned slices.
    x2d = jnp.transpose(x_btd.astype(f32), (1, 0, 2)).reshape(T * B, D)

    vmem = pltpu.MemorySpace.VMEM
    spike_counts = pl.pallas_call(
        _snn_kernel,
        out_shape=jax.ShapeDtypeStruct((B, Op), f32),
        in_specs=[
            pl.BlockSpec(memory_space=vmem),   # x (whole array, VMEM resident)
            pl.BlockSpec(memory_space=vmem),   # W1
            pl.BlockSpec(memory_space=vmem),   # b1
            pl.BlockSpec(memory_space=vmem),   # W2
            pl.BlockSpec(memory_space=vmem),   # b2
        ],
        out_specs=pl.BlockSpec(memory_space=vmem),
    )(x2d, w1p, b1p, w2p, b2p)

    # Softmax over the real output units only (padded lanes hold exact zeros and must
    # not enter the denominator).
    return jax.nn.softmax(spike_counts[:, :num_outputs], axis=1)


def _reference_forward(x_btd, w1_dh, b1_h, w2_ho, b2_o):
    """Pure-JAX reference (same math as the PyTorch/snntorch module)."""
    B, T, D = x_btd.shape
    H = w1_dh.shape[1]
    O = w2_ho.shape[1]
    mem1 = jnp.zeros((B, H), jnp.float32)
    mem2 = jnp.zeros((B, O), jnp.float32)
    acc = jnp.zeros((B, O), jnp.float32)
    for t in range(T):
        cur1 = x_btd[:, t, :] @ w1_dh + b1_h[None, :]
        r1 = (mem1 - THRESHOLD > 0).astype(jnp.float32)
        mem1 = BETA * mem1 + cur1 - r1 * THRESHOLD
        spk1 = (mem1 - THRESHOLD > 0).astype(jnp.float32)
        cur2 = spk1 @ w2_ho + b2_o[None, :]
        r2 = (mem2 - THRESHOLD > 0).astype(jnp.float32)
        mem2 = BETA * mem2 + cur2 - r2 * THRESHOLD
        spk2 = (mem2 - THRESHOLD > 0).astype(jnp.float32)
        acc = acc + spk2
    return jax.nn.softmax(acc, axis=1)


if __name__ == "__main__":
    # Module-implied sizes: num_inputs = 784, hidden = 50, num_outputs = 10.
    B, T, D, H, O = 2, 8, 784, 50, 10

    key = jax.random.PRNGKey(0)
    kx, kw1, kb1, kw2, kb2 = jax.random.split(key, 5)

    # Deterministic parameter init mimicking nn.Linear (uniform +/- 1/sqrt(fan_in)).
    lim1 = 1.0 / (D ** 0.5)
    lim2 = 1.0 / (H ** 0.5)
    w1 = jax.random.uniform(kw1, (D, H), jnp.float32, -lim1, lim1)   # fc1.weight.T
    b1 = jax.random.uniform(kb1, (H,), jnp.float32, -lim1, lim1)
    w2 = jax.random.uniform(kw2, (H, O), jnp.float32, -lim2, lim2)   # fc2.weight.T
    b2 = jax.random.uniform(kb2, (O,), jnp.float32, -lim2, lim2)

    # Input: (batch, time, features), scaled so the LIF neurons actually spike.
    x = 2.0 * jax.random.normal(kx, (B, T, D), jnp.float32)

    # One-time parameter padding (outside the per-call jit path).
    w1p, b1p, w2p, b2p = pad_params(w1, b1, w2, b2)
    w1p, b1p, w2p, b2p = jax.block_until_ready((w1p, b1p, w2p, b2p))

    y = jax.block_until_ready(
        leaky_two_layer_forward(x, w1p, b1p, w2p, b2p, num_outputs=O)
    )
    y_ref = _reference_forward(x, w1, b1, w2, b2)

    assert y.shape == (B, O)
    assert bool(jnp.all(jnp.isfinite(y)))
    assert bool(jnp.allclose(jnp.sum(y, axis=1), 1.0, atol=1e-5))
    assert bool(jnp.allclose(y, y_ref, atol=1e-5)), "mismatch vs JAX reference"

    print("KERNEL_OK")
</pallas_src>

<mosaic_0001>
module attributes {stable_mosaic.version = 11 : i64} {
  func.func @_snn_kernel(%arg0: memref<16x784xf32, #tpu.memory_space<vmem>>, %arg1: memref<784x128xf32, #tpu.memory_space<vmem>>, %arg2: memref<1x128xf32, #tpu.memory_space<vmem>>, %arg3: memref<128x128xf32, #tpu.memory_space<vmem>>, %arg4: memref<1x128xf32, #tpu.memory_space<vmem>>, %arg5: memref<2x128xf32, #tpu.memory_space<vmem>>) attributes {dimension_semantics = [], scalar_prefetch = 0 : i64, scratch_operands = 0 : i64, tpu.core_type = #tpu.core_type<tc>} {
    %c0 = arith.constant 0 : index
    %c0_0 = arith.constant 0 : index
    %0 = vector.load %arg0[%c0, %c0_0] : memref<16x784xf32, #tpu.memory_space<vmem>>, vector<16x784xf32>
    %c0_1 = arith.constant 0 : index
    %c0_2 = arith.constant 0 : index
    %1 = vector.load %arg1[%c0_1, %c0_2] : memref<784x128xf32, #tpu.memory_space<vmem>>, vector<784x128xf32>
    %cst = arith.constant dense<0.000000e+00> : vector<16x128xf32>
    %2 = tpu.matmul %0, %1, %cst {dimension_numbers = #tpu.dot_dimension_numbers<[1], [0], [0], [1], [0, 0, 1, 1], [], []>} : vector<16x784xf32>, vector<784x128xf32>, vector<16x128xf32> -> vector<16x128xf32>
    %c0_3 = arith.constant 0 : index
    %c0_4 = arith.constant 0 : index
    %3 = vector.load %arg2[%c0_3, %c0_4] : memref<1x128xf32, #tpu.memory_space<vmem>>, vector<1x128xf32>
    %4 = vector.broadcast %3 : vector<1x128xf32> to vector<16x128xf32>
    %5 = arith.addf %2, %4 : vector<16x128xf32>
    %cst_5 = arith.constant 0.000000e+00 : f32
    %6 = vector.broadcast %cst_5 : f32 to vector<2x128xf32>
    %cst_6 = arith.constant 0.000000e+00 : f32
    %7 = vector.broadcast %cst_6 : f32 to vector<2x128xf32>
    %8 = vector.extract_strided_slice %5 {offsets = [0, 0], sizes = [2, 128], strides = [1, 1]} : vector<16x128xf32> to vector<2x128xf32>
    %cst_7 = arith.constant 5.000000e-01 : f32
    %9 = vector.broadcast %cst_7 : f32 to vector<2x128xf32>
    %10 = arith.mulf %9, %6 : vector<2x128xf32>
    %11 = arith.addf %10, %8 : vector<2x128xf32>
    %cst_8 = arith.constant 1.000000e+00 : f32
    %12 = vector.broadcast %cst_8 : f32 to vector<2x128xf32>
    %13 = arith.mulf %7, %12 : vector<2x128xf32>
    %14 = arith.subf %11, %13 : vector<2x128xf32>
    %cst_9 = arith.constant 1.000000e+00 : f32
    %15 = vector.broadcast %cst_9 : f32 to vector<2x128xf32>
    %16 = arith.subf %14, %15 : vector<2x128xf32>
    %cst_10 = arith.constant 0.000000e+00 : f32
    %17 = vector.broadcast %cst_10 : f32 to vector<2x128xf32>
    %18 = arith.cmpf ogt, %16, %17 : vector<2x128xf32>
    %19 = arith.extui %18 : vector<2x128xi1> to vector<2x128xi32>
    %20 = arith.sitofp %19 : vector<2x128xi32> to vector<2x128xf32>
    %21 = vector.extract_strided_slice %5 {offsets = [2, 0], sizes = [2, 128], strides = [1, 1]} : vector<16x128xf32> to vector<2x128xf32>
    %cst_11 = arith.constant 5.000000e-01 : f32
    %22 = vector.broadcast %cst_11 : f32 to vector<2x128xf32>
    %23 = arith.mulf %22, %14 : vector<2x128xf32>
    %24 = arith.addf %23, %21 : vector<2x128xf32>
    %cst_12 = arith.constant 1.000000e+00 : f32
    %25 = vector.broadcast %cst_12 : f32 to vector<2x128xf32>
    %26 = arith.mulf %20, %25 : vector<2x128xf32>
    %27 = arith.subf %24, %26 : vector<2x128xf32>
    %cst_13 = arith.constant 1.000000e+00 : f32
    %28 = vector.broadcast %cst_13 : f32 to vector<2x128xf32>
    %29 = arith.subf %27, %28 : vector<2x128xf32>
    %cst_14 = arith.constant 0.000000e+00 : f32
    %30 = vector.broadcast %cst_14 : f32 to vector<2x128xf32>
    %31 = arith.cmpf ogt, %29, %30 : vector<2x128xf32>
    %32 = arith.extui %31 : vector<2x128xi1> to vector<2x128xi32>
    %33 = arith.sitofp %32 : vector<2x128xi32> to vector<2x128xf32>
    %34 = vector.extract_strided_slice %5 {offsets = [4, 0], sizes = [2, 128], strides = [1, 1]} : vector<16x128xf32> to vector<2x128xf32>
    %cst_15 = arith.constant 5.000000e-01 : f32
    %35 = vector.broadcast %cst_15 : f32 to vector<2x128xf32>
    %36 = arith.mulf %35, %27 : vector<2x128xf32>
    %37 = arith.addf %36, %34 : vector<2x128xf32>
    %cst_16 = arith.constant 1.000000e+00 : f32
    %38 = vector.broadcast %cst_16 : f32 to vector<2x128xf32>
    %39 = arith.mulf %33, %38 : vector<2x128xf32>
    %40 = arith.subf %37, %39 : vector<2x128xf32>
    %cst_17 = arith.constant 1.000000e+00 : f32
    %41 = vector.broadcast %cst_17 : f32 to vector<2x128xf32>
    %42 = arith.subf %40, %41 : vector<2x128xf32>
    %cst_18 = arith.constant 0.000000e+00 : f32
    %43 = vector.broadcast %cst_18 : f32 to vector<2x128xf32>
    %44 = arith.cmpf ogt, %42, %43 : vector<2x128xf32>
    %45 = arith.extui %44 : vector<2x128xi1> to vector<2x128xi32>
    %46 = arith.sitofp %45 : vector<2x128xi32> to vector<2x128xf32>
    %47 = vector.extract_strided_slice %5 {offsets = [6, 0], sizes = [2, 128], strides = [1, 1]} : vector<16x128xf32> to vector<2x128xf32>
    %cst_19 = arith.constant 5.000000e-01 : f32
    %48 = vector.broadcast %cst_19 : f32 to vector<2x128xf32>
    %49 = arith.mulf %48, %40 : vector<2x128xf32>
    %50 = arith.addf %49, %47 : vector<2x128xf32>
    %cst_20 = arith.constant 1.000000e+00 : f32
    %51 = vector.broadcast %cst_20 : f32 to vector<2x128xf32>
    %52 = arith.mulf %46, %51 : vector<2x128xf32>
    %53 = arith.subf %50, %52 : vector<2x128xf32>
    %cst_21 = arith.constant 1.000000e+00 : f32
    %54 = vector.broadcast %cst_21 : f32 to vector<2x128xf32>
    %55 = arith.subf %53, %54 : vector<2x128xf32>
    %cst_22 = arith.constant 0.000000e+00 : f32
    %56 = vector.broadcast %cst_22 : f32 to vector<2x128xf32>
    %57 = arith.cmpf ogt, %55, %56 : vector<2x128xf32>
    %58 = arith.extui %57 : vector<2x128xi1> to vector<2x128xi32>
    %59 = arith.sitofp %58 : vector<2x128xi32> to vector<2x128xf32>
    %60 = vector.extract_strided_slice %5 {offsets = [8, 0], sizes = [2, 128], strides = [1, 1]} : vector<16x128xf32> to vector<2x128xf32>
    %cst_23 = arith.constant 5.000000e-01 : f32
    %61 = vector.broadcast %cst_23 : f32 to vector<2x128xf32>
    %62 = arith.mulf %61, %53 : vector<2x128xf32>
    %63 = arith.addf %62, %60 : vector<2x128xf32>
    %cst_24 = arith.constant 1.000000e+00 : f32
    %64 = vector.broadcast %cst_24 : f32 to vector<2x128xf32>
    %65 = arith.mulf %59, %64 : vector<2x128xf32>
    %66 = arith.subf %63, %65 : vector<2x128xf32>
    %cst_25 = arith.constant 1.000000e+00 : f32
    %67 = vector.broadcast %cst_25 : f32 to vector<2x128xf32>
    %68 = arith.subf %66, %67 : vector<2x128xf32>
    %cst_26 = arith.constant 0.000000e+00 : f32
    %69 = vector.broadcast %cst_26 : f32 to vector<2x128xf32>
    %70 = arith.cmpf ogt, %68, %69 : vector<2x128xf32>
    %71 = arith.extui %70 : vector<2x128xi1> to vector<2x128xi32>
    %72 = arith.sitofp %71 : vector<2x128xi32> to vector<2x128xf32>
    %73 = vector.extract_strided_slice %5 {offsets = [10, 0], sizes = [2, 128], strides = [1, 1]} : vector<16x128xf32> to vector<2x128xf32>
    %cst_27 = arith.constant 5.000000e-01 : f32
    %74 = vector.broadcast %cst_27 : f32 to vector<2x128xf32>
    %75 = arith.mulf %74, %66 : vector<2x128xf32>
    %76 = arith.addf %75, %73 : vector<2x128xf32>
    %cst_28 = arith.constant 1.000000e+00 : f32
    %77 = vector.broadcast %cst_28 : f32 to vector<2x128xf32>
    %78 = arith.mulf %72, %77 : vector<2x128xf32>
    %79 = arith.subf %76, %78 : vector<2x128xf32>
    %cst_29 = arith.constant 1.000000e+00 : f32
    %80 = vector.broadcast %cst_29 : f32 to vector<2x128xf32>
    %81 = arith.subf %79, %80 : vector<2x128xf32>
    %cst_30 = arith.constant 0.000000e+00 : f32
    %82 = vector.broadcast %cst_30 : f32 to vector<2x128xf32>
    %83 = arith.cmpf ogt, %81, %82 : vector<2x128xf32>
    %84 = arith.extui %83 : vector<2x128xi1> to vector<2x128xi32>
    %85 = arith.sitofp %84 : vector<2x128xi32> to vector<2x128xf32>
    %86 = vector.extract_strided_slice %5 {offsets = [12, 0], sizes = [2, 128], strides = [1, 1]} : vector<16x128xf32> to vector<2x128xf32>
    %cst_31 = arith.constant 5.000000e-01 : f32
    %87 = vector.broadcast %cst_31 : f32 to vector<2x128xf32>
    %88 = arith.mulf %87, %79 : vector<2x128xf32>
    %89 = arith.addf %88, %86 : vector<2x128xf32>
    %cst_32 = arith.constant 1.000000e+00 : f32
    %90 = vector.broadcast %cst_32 : f32 to vector<2x128xf32>
    %91 = arith.mulf %85, %90 : vector<2x128xf32>
    %92 = arith.subf %89, %91 : vector<2x128xf32>
    %cst_33 = arith.constant 1.000000e+00 : f32
    %93 = vector.broadcast %cst_33 : f32 to vector<2x128xf32>
    %94 = arith.subf %92, %93 : vector<2x128xf32>
    %cst_34 = arith.constant 0.000000e+00 : f32
    %95 = vector.broadcast %cst_34 : f32 to vector<2x128xf32>
    %96 = arith.cmpf ogt, %94, %95 : vector<2x128xf32>
    %97 = arith.extui %96 : vector<2x128xi1> to vector<2x128xi32>
    %98 = arith.sitofp %97 : vector<2x128xi32> to vector<2x128xf32>
    %99 = vector.extract_strided_slice %5 {offsets = [14, 0], sizes = [2, 128], strides = [1, 1]} : vector<16x128xf32> to vector<2x128xf32>
    %cst_35 = arith.constant 5.000000e-01 : f32
    %100 = vector.broadcast %cst_35 : f32 to vector<2x128xf32>
    %101 = arith.mulf %100, %92 : vector<2x128xf32>
    %102 = arith.addf %101, %99 : vector<2x128xf32>
    %cst_36 = arith.constant 1.000000e+00 : f32
    %103 = vector.broadcast %cst_36 : f32 to vector<2x128xf32>
    %104 = arith.mulf %98, %103 : vector<2x128xf32>
    %105 = arith.subf %102, %104 : vector<2x128xf32>
    %cst_37 = arith.constant 1.000000e+00 : f32
    %106 = vector.broadcast %cst_37 : f32 to vector<2x128xf32>
    %107 = arith.subf %105, %106 : vector<2x128xf32>
    %cst_38 = arith.constant 0.000000e+00 : f32
    %108 = vector.broadcast %cst_38 : f32 to vector<2x128xf32>
    %109 = arith.cmpf ogt, %107, %108 : vector<2x128xf32>
    %110 = arith.extui %109 : vector<2x128xi1> to vector<2x128xi32>
    %111 = arith.sitofp %110 : vector<2x128xi32> to vector<2x128xf32>
    %112 = tpu.concatenate %20, %33, %46, %59, %72, %85, %98, %111 in 0 : vector<2x128xf32>, vector<2x128xf32>, vector<2x128xf32>, vector<2x128xf32>, vector<2x128xf32>, vector<2x128xf32>, vector<2x128xf32>, vector<2x128xf32> -> vector<16x128xf32>
    %c0_39 = arith.constant 0 : index
    %c0_40 = arith.constant 0 : index
    %113 = vector.load %arg3[%c0_39, %c0_40] : memref<128x128xf32, #tpu.memory_space<vmem>>, vector<128x128xf32>
    %cst_41 = arith.constant dense<0.000000e+00> : vector<16x128xf32>
    %114 = tpu.matmul %112, %113, %cst_41 {dimension_numbers = #tpu.dot_dimension_numbers<[1], [0], [0], [1], [0, 0, 1, 1], [], []>} : vector<16x128xf32>, vector<128x128xf32>, vector<16x128xf32> -> vector<16x128xf32>
    %c0_42 = arith.constant 0 : index
    %c0_43 = arith.constant 0 : index
    %115 = vector.load %arg4[%c0_42, %c0_43] : memref<1x128xf32, #tpu.memory_space<vmem>>, vector<1x128xf32>
    %116 = vector.broadcast %115 : vector<1x128xf32> to vector<16x128xf32>
    %117 = arith.addf %114, %116 : vector<16x128xf32>
    %cst_44 = arith.constant 0.000000e+00 : f32
    %118 = vector.broadcast %cst_44 : f32 to vector<2x128xf32>
    %cst_45 = arith.constant 0.000000e+00 : f32
    %119 = vector.broadcast %cst_45 : f32 to vector<2x128xf32>
    %cst_46 = arith.constant 0.000000e+00 : f32
    %120 = vector.broadcast %cst_46 : f32 to vector<2x128xf32>
    %121 = vector.extract_strided_slice %117 {offsets = [0, 0], sizes = [2, 128], strides = [1, 1]} : vector<16x128xf32> to vector<2x128xf32>
    %cst_47 = arith.constant 5.000000e-01 : f32
    %122 = vector.broadcast %cst_47 : f32 to vector<2x128xf32>
    %123 = arith.mulf %122, %118 : vector<2x128xf32>
    %124 = arith.addf %123, %121 : vector<2x128xf32>
    %cst_48 = arith.constant 1.000000e+00 : f32
    %125 = vector.broadcast %cst_48 : f32 to vector<2x128xf32>
    %126 = arith.mulf %119, %125 : vector<2x128xf32>
    %127 = arith.subf %124, %126 : vector<2x128xf32>
    %cst_49 = arith.constant 1.000000e+00 : f32
    %128 = vector.broadcast %cst_49 : f32 to vector<2x128xf32>
    %129 = arith.subf %127, %128 : vector<2x128xf32>
    %cst_50 = arith.constant 0.000000e+00 : f32
    %130 = vector.broadcast %cst_50 : f32 to vector<2x128xf32>
    %131 = arith.cmpf ogt, %129, %130 : vector<2x128xf32>
    %132 = arith.extui %131 : vector<2x128xi1> to vector<2x128xi32>
    %133 = arith.sitofp %132 : vector<2x128xi32> to vector<2x128xf32>
    %134 = arith.addf %120, %133 : vector<2x128xf32>
    %135 = vector.extract_strided_slice %117 {offsets = [2, 0], sizes = [2, 128], strides = [1, 1]} : vector<16x128xf32> to vector<2x128xf32>
    %cst_51 = arith.constant 5.000000e-01 : f32
    %136 = vector.broadcast %cst_51 : f32 to vector<2x128xf32>
    %137 = arith.mulf %136, %127 : vector<2x128xf32>
    %138 = arith.addf %137, %135 : vector<2x128xf32>
    %cst_52 = arith.constant 1.000000e+00 : f32
    %139 = vector.broadcast %cst_52 : f32 to vector<2x128xf32>
    %140 = arith.mulf %133, %139 : vector<2x128xf32>
    %141 = arith.subf %138, %140 : vector<2x128xf32>
    %cst_53 = arith.constant 1.000000e+00 : f32
    %142 = vector.broadcast %cst_53 : f32 to vector<2x128xf32>
    %143 = arith.subf %141, %142 : vector<2x128xf32>
    %cst_54 = arith.constant 0.000000e+00 : f32
    %144 = vector.broadcast %cst_54 : f32 to vector<2x128xf32>
    %145 = arith.cmpf ogt, %143, %144 : vector<2x128xf32>
    %146 = arith.extui %145 : vector<2x128xi1> to vector<2x128xi32>
    %147 = arith.sitofp %146 : vector<2x128xi32> to vector<2x128xf32>
    %148 = arith.addf %134, %147 : vector<2x128xf32>
    %149 = vector.extract_strided_slice %117 {offsets = [4, 0], sizes = [2, 128], strides = [1, 1]} : vector<16x128xf32> to vector<2x128xf32>
    %cst_55 = arith.constant 5.000000e-01 : f32
    %150 = vector.broadcast %cst_55 : f32 to vector<2x128xf32>
    %151 = arith.mulf %150, %141 : vector<2x128xf32>
    %152 = arith.addf %151, %149 : vector<2x128xf32>
    %cst_56 = arith.constant 1.000000e+00 : f32
    %153 = vector.broadcast %cst_56 : f32 to vector<2x128xf32>
    %154 = arith.mulf %147, %153 : vector<2x128xf32>
    %155 = arith.subf %152, %154 : vector<2x128xf32>
    %cst_57 = arith.constant 1.000000e+00 : f32
    %156 = vector.broadcast %cst_57 : f32 to vector<2x128xf32>
    %157 = arith.subf %155, %156 : vector<2x128xf32>
    %cst_58 = arith.constant 0.000000e+00 : f32
    %158 = vector.broadcast %cst_58 : f32 to vector<2x128xf32>
    %159 = arith.cmpf ogt, %157, %158 : vector<2x128xf32>
    %160 = arith.extui %159 : vector<2x128xi1> to vector<2x128xi32>
    %161 = arith.sitofp %160 : vector<2x128xi32> to vector<2x128xf32>
    %162 = arith.addf %148, %161 : vector<2x128xf32>
    %163 = vector.extract_strided_slice %117 {offsets = [6, 0], sizes = [2, 128], strides = [1, 1]} : vector<16x128xf32> to vector<2x128xf32>
    %cst_59 = arith.constant 5.000000e-01 : f32
    %164 = vector.broadcast %cst_59 : f32 to vector<2x128xf32>
    %165 = arith.mulf %164, %155 : vector<2x128xf32>
    %166 = arith.addf %165, %163 : vector<2x128xf32>
    %cst_60 = arith.constant 1.000000e+00 : f32
    %167 = vector.broadcast %cst_60 : f32 to vector<2x128xf32>
    %168 = arith.mulf %161, %167 : vector<2x128xf32>
    %169 = arith.subf %166, %168 : vector<2x128xf32>
    %cst_61 = arith.constant 1.000000e+00 : f32
    %170 = vector.broadcast %cst_61 : f32 to vector<2x128xf32>
    %171 = arith.subf %169, %170 : vector<2x128xf32>
    %cst_62 = arith.constant 0.000000e+00 : f32
    %172 = vector.broadcast %cst_62 : f32 to vector<2x128xf32>
    %173 = arith.cmpf ogt, %171, %172 : vector<2x128xf32>
    %174 = arith.extui %173 : vector<2x128xi1> to vector<2x128xi32>
    %175 = arith.sitofp %174 : vector<2x128xi32> to vector<2x128xf32>
    %176 = arith.addf %162, %175 : vector<2x128xf32>
    %177 = vector.extract_strided_slice %117 {offsets = [8, 0], sizes = [2, 128], strides = [1, 1]} : vector<16x128xf32> to vector<2x128xf32>
    %cst_63 = arith.constant 5.000000e-01 : f32
    %178 = vector.broadcast %cst_63 : f32 to vector<2x128xf32>
    %179 = arith.mulf %178, %169 : vector<2x128xf32>
    %180 = arith.addf %179, %177 : vector<2x128xf32>
    %cst_64 = arith.constant 1.000000e+00 : f32
    %181 = vector.broadcast %cst_64 : f32 to vector<2x128xf32>
    %182 = arith.mulf %175, %181 : vector<2x128xf32>
    %183 = arith.subf %180, %182 : vector<2x128xf32>
    %cst_65 = arith.constant 1.000000e+00 : f32
    %184 = vector.broadcast %cst_65 : f32 to vector<2x128xf32>
    %185 = arith.subf %183, %184 : vector<2x128xf32>
    %cst_66 = arith.constant 0.000000e+00 : f32
    %186 = vector.broadcast %cst_66 : f32 to vector<2x128xf32>
    %187 = arith.cmpf ogt, %185, %186 : vector<2x128xf32>
    %188 = arith.extui %187 : vector<2x128xi1> to vector<2x128xi32>
    %189 = arith.sitofp %188 : vector<2x128xi32> to vector<2x128xf32>
    %190 = arith.addf %176, %189 : vector<2x128xf32>
    %191 = vector.extract_strided_slice %117 {offsets = [10, 0], sizes = [2, 128], strides = [1, 1]} : vector<16x128xf32> to vector<2x128xf32>
    %cst_67 = arith.constant 5.000000e-01 : f32
    %192 = vector.broadcast %cst_67 : f32 to vector<2x128xf32>
    %193 = arith.mulf %192, %183 : vector<2x128xf32>
    %194 = arith.addf %193, %191 : vector<2x128xf32>
    %cst_68 = arith.constant 1.000000e+00 : f32
    %195 = vector.broadcast %cst_68 : f32 to vector<2x128xf32>
    %196 = arith.mulf %189, %195 : vector<2x128xf32>
    %197 = arith.subf %194, %196 : vector<2x128xf32>
    %cst_69 = arith.constant 1.000000e+00 : f32
    %198 = vector.broadcast %cst_69 : f32 to vector<2x128xf32>
    %199 = arith.subf %197, %198 : vector<2x128xf32>
    %cst_70 = arith.constant 0.000000e+00 : f32
    %200 = vector.broadcast %cst_70 : f32 to vector<2x128xf32>
    %201 = arith.cmpf ogt, %199, %200 : vector<2x128xf32>
    %202 = arith.extui %201 : vector<2x128xi1> to vector<2x128xi32>
    %203 = arith.sitofp %202 : vector<2x128xi32> to vector<2x128xf32>
    %204 = arith.addf %190, %203 : vector<2x128xf32>
    %205 = vector.extract_strided_slice %117 {offsets = [12, 0], sizes = [2, 128], strides = [1, 1]} : vector<16x128xf32> to vector<2x128xf32>
    %cst_71 = arith.constant 5.000000e-01 : f32
    %206 = vector.broadcast %cst_71 : f32 to vector<2x128xf32>
    %207 = arith.mulf %206, %197 : vector<2x128xf32>
    %208 = arith.addf %207, %205 : vector<2x128xf32>
    %cst_72 = arith.constant 1.000000e+00 : f32
    %209 = vector.broadcast %cst_72 : f32 to vector<2x128xf32>
    %210 = arith.mulf %203, %209 : vector<2x128xf32>
    %211 = arith.subf %208, %210 : vector<2x128xf32>
    %cst_73 = arith.constant 1.000000e+00 : f32
    %212 = vector.broadcast %cst_73 : f32 to vector<2x128xf32>
    %213 = arith.subf %211, %212 : vector<2x128xf32>
    %cst_74 = arith.constant 0.000000e+00 : f32
    %214 = vector.broadcast %cst_74 : f32 to vector<2x128xf32>
    %215 = arith.cmpf ogt, %213, %214 : vector<2x128xf32>
    %216 = arith.extui %215 : vector<2x128xi1> to vector<2x128xi32>
    %217 = arith.sitofp %216 : vector<2x128xi32> to vector<2x128xf32>
    %218 = arith.addf %204, %217 : vector<2x128xf32>
    %219 = vector.extract_strided_slice %117 {offsets = [14, 0], sizes = [2, 128], strides = [1, 1]} : vector<16x128xf32> to vector<2x128xf32>
    %cst_75 = arith.constant 5.000000e-01 : f32
    %220 = vector.broadcast %cst_75 : f32 to vector<2x128xf32>
    %221 = arith.mulf %220, %211 : vector<2x128xf32>
    %222 = arith.addf %221, %219 : vector<2x128xf32>
    %cst_76 = arith.constant 1.000000e+00 : f32
    %223 = vector.broadcast %cst_76 : f32 to vector<2x128xf32>
    %224 = arith.mulf %217, %223 : vector<2x128xf32>
    %225 = arith.subf %222, %224 : vector<2x128xf32>
    %cst_77 = arith.constant 1.000000e+00 : f32
    %226 = vector.broadcast %cst_77 : f32 to vector<2x128xf32>
    %227 = arith.subf %225, %226 : vector<2x128xf32>
    %cst_78 = arith.constant 0.000000e+00 : f32
    %228 = vector.broadcast %cst_78 : f32 to vector<2x128xf32>
    %229 = arith.cmpf ogt, %227, %228 : vector<2x128xf32>
    %230 = arith.extui %229 : vector<2x128xi1> to vector<2x128xi32>
    %231 = arith.sitofp %230 : vector<2x128xi32> to vector<2x128xf32>
    %232 = arith.addf %218, %231 : vector<2x128xf32>
    %c0_79 = arith.constant 0 : index
    %c0_80 = arith.constant 0 : index
    %233 = vector.load %arg5[%c0_79, %c0_80] : memref<2x128xf32, #tpu.memory_space<vmem>>, vector<2x128xf32>
    tpu.vector_store %arg5[%c0_79, %c0_80], %232 {strides = array<i32>} : memref<2x128xf32, #tpu.memory_space<vmem>>, vector<2x128xf32>,
    return
  }
}

</mosaic_0001>

<llo_original>
// kernel: leaky_two_layer_forward.1
$region0: #{leaky_two_layer_forward.1}
  #allocation0 [shape = 'u32[]', space=smem, size = 0x4, offset = 0x4, fixed_abs, tag = 'smem constant byte address 0x4 - core index']
  #allocation1 [shape = 'u32[144,128]{1,0:T(1,128)}', space=vmem, size = 0x12000, scoped, tag = 'internal scratch']
  %s0 = inlined_call_operand.vmem [shape: f32[16,784], index: 0, kind: input, shape index: {}]
  %s1 = inlined_call_operand.hbm [shape: f32[784,128], index: 1, kind: input, shape index: {}]
  %s2 = inlined_call_operand.vmem [shape: f32[1,128], index: 2, kind: input, shape index: {}]
  %s3 = inlined_call_operand.vmem [shape: f32[128,128], index: 3, kind: input, shape index: {}]
  %s4 = inlined_call_operand.vmem [shape: f32[1,128], index: 4, kind: input, shape index: {}]
  %s5 = inlined_call_operand.vmem [shape: f32[2,128], index: 5, kind: output, shape index: {}]
  %s6 = sld [smem:[#allocation0]]
  $region34: #{leaky_two_layer_forward.1} parent=0
    _
  %s8 = ssub.s32 1, %s6
  %s9 = scalar_select 0, %s8, %s6
  $region1: #{leaky_two_layer_forward.1} parent=0
    #allocation2 [shape = 'u8[401408]{0}', space=vmem, size = 0x62000, scoped, tag = 'input window, operand 1, single buffered']
    #allocation3 [shape = 's32[1]{0}', space=sflag, size = 0x4, scoped, tag = 'scoped memory for leaky_two_layer_forward.1']
    %10 = vsyncpa [#allocation3], 0
    // Predicated region
    $region2: #{leaky_two_layer_forward.1} parent=1 // pred_check
      _
    $region3: #{leaky_two_layer_forward.1} parent=1 // pred_check_branch
      %12 = sbr.rel (0) target = $region5
    $region4: #{leaky_two_layer_forward.1} parent=1 // pred_region
      _
    $region5: #{leaky_two_layer_forward.1} parent=1 // pred_fallthru
      _
    // Predicated region
    $region6: #{leaky_two_layer_forward.1} parent=1 // pred_check
      _
    $region7: #{leaky_two_layer_forward.1} parent=1 // pred_check_branch
      %14 = sbr.rel (0) target = $region9
    $region8: #{leaky_two_layer_forward.1} parent=1 // pred_region
      %s16 = ssub.s32 12544, 12544
      %17 = vsyncadd [#allocation3], %s16
      %s18 = sshll.u32 [#allocation2], 4
      %s19 = int_to_ptr.vmem [resolvable:$true] %s18
      %24 = dma.hbm_to_vmem [thread:$0]  %s1, 12544, %s19, [#allocation3], 128, 128, 8
    $region9: #{leaky_two_layer_forward.1} parent=1 // pred_fallthru
      _
    // Predicated region
    $region10: #{leaky_two_layer_forward.1} parent=1 // pred_check
      _
    $region11: #{leaky_two_layer_forward.1} parent=1 // pred_check_branch
      %26 = sbr.rel (0) target = $region13
    $region12: #{leaky_two_layer_forward.1} parent=1 // pred_region
      _
    $region13: #{leaky_two_layer_forward.1} parent=1 // pred_fallthru
      _
    // Predicated region
    $region14: #{leaky_two_layer_forward.1} parent=1 // pred_check
      _
    $region15: #{leaky_two_layer_forward.1} parent=1 // pred_check_branch
      %28 = sbr.rel (0) target = $region17
    $region16: #{leaky_two_layer_forward.1} parent=1 // pred_region
      _
    $region17: #{leaky_two_layer_forward.1} parent=1 // pred_fallthru
      _
    // Predicated region
    $region18: #{leaky_two_layer_forward.1} parent=1 // pred_check
      _
    $region19: #{leaky_two_layer_forward.1} parent=1 // pred_check_branch
      %30 = sbr.rel (0) target = $region21
    $region20: #{leaky_two_layer_forward.1} parent=1 // pred_region
      _
    $region21: #{leaky_two_layer_forward.1} parent=1 // pred_fallthru
      _
    // Predicated region
    $region22: #{leaky_two_layer_forward.1} parent=1 // pred_check
      _
    $region23: #{leaky_two_layer_forward.1} parent=1 // pred_check_branch
      %32 = sbr.rel (0) target = $region25
    $region24: #{leaky_two_layer_forward.1} parent=1 // pred_region
      %33 = dma.done [#allocation3], 12544
    $region25: #{leaky_two_layer_forward.1} parent=1 // pred_fallthru
      _
    %v34 = vld [vmem:[%s0] sm:$0xff]
    %v35 = vld [vmem:[%s0 + $0x8] sm:$0xff]
    %v36 = vld [vmem:[%s0 + $0x10] sm:$0xff]
    %v37 = vld [vmem:[%s0 + $0x18] sm:$0xff]
    %v38 = vld [vmem:[%s0 + $0x20] sm:$0xff]
    %v39 = vld [vmem:[%s0 + $0x28] sm:$0xff]
    %v40 = vld [vmem:[%s0 + $0x30] sm:$0xff]
    %v41 = vld [vmem:[%s0 + $0x38] sm:$0xff]
    %v42 = vld [vmem:[%s0 + $0x40] sm:$0xff]
    %v43 = vld [vmem:[%s0 + $0x48] sm:$0xff]
    %v44 = vld [vmem:[%s0 + $0x50] sm:$0xff]
    %v45 = vld [vmem:[%s0 + $0x58] sm:$0xff]
    %v46 = vld [vmem:[%s0 + $0x60] sm:$0xff]
    %v47 = vld [vmem:[%s0 + $0x68] sm:$0xff]
    %v48 = vld [vmem:[#allocation2] sm:$0xff]
    %v49 = vld [vmem:[#allocation2 + $0x8] sm:$0xff]
    %v50 = vld [vmem:[#allocation2 + $0x10] sm:$0xff]
    %v51 = vld [vmem:[#allocation2 + $0x18] sm:$0xff]
    %v52 = vld [vmem:[#allocation2 + $0x20] sm:$0xff]
    %v53 = vld [vmem:[#allocation2 + $0x28] sm:$0xff]
    %v54 = vld [vmem:[#allocation2 + $0x30] sm:$0xff]
    %v55 = vld [vmem:[#allocation2 + $0x38] sm:$0xff]
    %v56 = vld [vmem:[#allocation2 + $0x40] sm:$0xff]
    %v57 = vld [vmem:[#allocation2 + $0x48] sm:$0xff]
    %v58 = vld [vmem:[#allocation2 + $0x50] sm:$0xff]
    %v59 = vld [vmem:[#allocation2 + $0x58] sm:$0xff]
    %v60 = vld [vmem:[#allocation2 + $0x60] sm:$0xff]
    %v61 = vld [vmem:[#allocation2 + $0x68] sm:$0xff]
    %v62 = vld [vmem:[#allocation2 + $0x70] sm:$0xff]
    %v63 = vld [vmem:[#allocation2 + $0x78] sm:$0xff]
    %v64 = vld [vmem:[#allocation2 + $0x80] sm:$0xff]
    %v65 = vld [vmem:[#allocation2 + $0x88] sm:$0xff]
    %v66 = vld [vmem:[#allocation2 + $0x90] sm:$0xff]
    %v67 = vld [vmem:[#allocation2 + $0x98] sm:$0xff]
    %v68 = vld [vmem:[#allocation2 + $0xa0] sm:$0xff]
    %v69 = vld [vmem:[#allocation2 + $0xa8] sm:$0xff]
    %v70 = vld [vmem:[#allocation2 + $0xb0] sm:$0xff]
    %v71 = vld [vmem:[#allocation2 + $0xb8] sm:$0xff]
    %v72 = vld [vmem:[#allocation2 + $0xc0] sm:$0xff]
    %v73 = vld [vmem:[#allocation2 + $0xc8] sm:$0xff]
    %v74 = vld [vmem:[#allocation2 + $0xd0] sm:$0xff]
    %v75 = vld [vmem:[#allocation2 + $0xd8] sm:$0xff]
    %v76 = vld [vmem:[#allocation2 + $0xe0] sm:$0xff]
    %v77 = vld [vmem:[#allocation2 + $0xe8] sm:$0xff]
    %v78 = vld [vmem:[#allocation2 + $0xf0] sm:$0xff]
    %v79 = vld [vmem:[#allocation2 + $0xf8] sm:$0xff]
    %v80 = vld [vmem:[#allocation2 + $0x100] sm:$0xff]
    %v81 = vld [vmem:[#allocation2 + $0x108] sm:$0xff]
    %v82 = vld [vmem:[#allocation2 + $0x110] sm:$0xff]
    %v83 = vld [vmem:[#allocation2 + $0x118] sm:$0xff]
    %v84 = vld [vmem:[#allocation2 + $0x120] sm:$0xff]
    %v85 = vld [vmem:[#allocation2 + $0x128] sm:$0xff]
    %v86 = vld [vmem:[#allocation2 + $0x130] sm:$0xff]
    %v87 = vld [vmem:[#allocation2 + $0x138] sm:$0xff]
    %v88 = vld [vmem:[#allocation2 + $0x140] sm:$0xff]
    %v89 = vld [vmem:[#allocation2 + $0x148] sm:$0xff]
    %v90 = vld [vmem:[#allocation2 + $0x150] sm:$0xff]
    %v91 = vld [vmem:[#allocation2 + $0x158] sm:$0xff]
    %v92 = vld [vmem:[#allocation2 + $0x160] sm:$0xff]
    %v93 = vld [vmem:[#allocation2 + $0x168] sm:$0xff]
    %v94 = vld [vmem:[#allocation2 + $0x170] sm:$0xff]
    %v95 = vld [vmem:[#allocation2 + $0x178] sm:$0xff]
    %v96 = vld [vmem:[#allocation2 + $0x180] sm:$0xff]
    %v97 = vld [vmem:[#allocation2 + $0x188] sm:$0xff]
    %v98 = vld [vmem:[#allocation2 + $0x190] sm:$0xff]
    %v99 = vld [vmem:[#allocation2 + $0x198] sm:$0xff]
    %v100 = vld [vmem:[#allocation2 + $0x1a0] sm:$0xff]
    %v101 = vld [vmem:[#allocation2 + $0x1a8] sm:$0xff]
    %v102 = vld [vmem:[#allocation2 + $0x1b0] sm:$0xff]
    %v103 = vld [vmem:[#allocation2 + $0x1b8] sm:$0xff]
    %v104 = vld [vmem:[#allocation2 + $0x1c0] sm:$0xff]
    %v105 = vld [vmem:[#allocation2 + $0x1c8] sm:$0xff]
    %v106 = vld [vmem:[#allocation2 + $0x1d0] sm:$0xff]
    %v107 = vld [vmem:[#allocation2 + $0x1d8] sm:$0xff]
    %v108 = vld [vmem:[#allocation2 + $0x1e0] sm:$0xff]
    %v109 = vld [vmem:[#allocation2 + $0x1e8] sm:$0xff]
    %v110 = vld [vmem:[#allocation2 + $0x1f0] sm:$0xff]
    %v111 = vld [vmem:[#allocation2 + $0x1f8] sm:$0xff]
    %v112 = vld [vmem:[#allocation2 + $0x200] sm:$0xff]
    %v113 = vld [vmem:[#allocation2 + $0x208] sm:$0xff]
    %v114 = vld [vmem:[#allocation2 + $0x210] sm:$0xff]
    %v115 = vld [vmem:[#allocation2 + $0x218] sm:$0xff]
    %v116 = vld [vmem:[#allocation2 + $0x220] sm:$0xff]
    %v117 = vld [vmem:[#allocation2 + $0x228] sm:$0xff]
    %v118 = vld [vmem:[#allocation2 + $0x230] sm:$0xff]
    %v119 = vld [vmem:[#allocation2 + $0x238] sm:$0xff]
    %v120 = vld [vmem:[#allocation2 + $0x240] sm:$0xff]
    %v121 = vld [vmem:[#allocation2 + $0x248] sm:$0xff]
    %v122 = vld [vmem:[#allocation2 + $0x250] sm:$0xff]
    %v123 = vld [vmem:[#allocation2 + $0x258] sm:$0xff]
    %v124 = vld [vmem:[#allocation2 + $0x260] sm:$0xff]
    %v125 = vld [vmem:[#allocation2 + $0x268] sm:$0xff]
    %v126 = vld [vmem:[#allocation2 + $0x270] sm:$0xff]
    %v127 = vld [vmem:[#allocation2 + $0x278] sm:$0xff]
    %v128 = vld [vmem:[#allocation2 + $0x280] sm:$0xff]
    %v129 = vld [vmem:[#allocation2 + $0x288] sm:$0xff]
    %v130 = vld [vmem:[#allocation2 + $0x290] sm:$0xff]
    %v131 = vld [vmem:[#allocation2 + $0x298] sm:$0xff]
    %v132 = vld [vmem:[#allocation2 + $0x2a0] sm:$0xff]
    %v133 = vld [vmem:[#allocation2 + $0x2a8] sm:$0xff]
    %v134 = vld [vmem:[#allocation2 + $0x2b0] sm:$0xff]
    %v135 = vld [vmem:[#allocation2 + $0x2b8] sm:$0xff]
    %v136 = vld [vmem:[#allocation2 + $0x2c0] sm:$0xff]
    %v137 = vld [vmem:[#allocation2 + $0x2c8] sm:$0xff]
    %v138 = vld [vmem:[#allocation2 + $0x2d0] sm:$0xff]
    %v139 = vld [vmem:[#allocation2 + $0x2d8] sm:$0xff]
    %v140 = vld [vmem:[#allocation2 + $0x2e0] sm:$0xff]
    %v141 = vld [vmem:[#allocation2 + $0x2e8] sm:$0xff]
    %v142 = vld [vmem:[#allocation2 + $0x2f0] sm:$0xff]
    %v143 = vld [vmem:[#allocation2 + $0x2f8] sm:$0xff]
    %v144 = vld [vmem:[#allocation2 + $0x300] sm:$0xff]
    %v145 = vld [vmem:[#allocation2 + $0x308] sm:$0xff]
    %v146 = vld [vmem:[%s2] sm:$0x1]
    %v148 = vlaneseq
    %v149 = vshrl.u32 %v148, 7
    %v150 = vsub.s32 0, %v149
    %v151 = vrot.slane %v146, %v150
    %vm153 = vcmask 130048
    %v155 = vsel %vm153, %v40, 0
    %v158 = vsel %vm153, %v47, 0
    %160 = vmatprep.subr.mxu0 0.0
    %161 = vmatpush1.msra.mxu0 %v63
    %162 = vmatprep.subr.mxu0 0.0
    %163 = vmatpush1.msra.mxu0 %v62
    %164 = vmatprep.subr.mxu0 0.0
    %165 = vmatpush1.msra.mxu0 %v61
    %166 = vmatprep.subr.mxu0 0.0
    %167 = vmatpush1.msra.mxu0 %v60
    %168 = vmatprep.subr.mxu0 0.0
    %169 = vmatpush1.msra.mxu0 %v59
    %170 = vmatprep.subr.mxu0 0.0
    %171 = vmatpush1.msra.mxu0 %v58
    %172 = vmatprep.subr.mxu0 0.0
    %173 = vmatpush1.msra.mxu0 %v57
    %174 = vmatprep.subr.mxu0 0.0
    %175 = vmatpush1.msra.mxu0 %v56
    %176 = vmatprep.subr.mxu0 0.0
    %177 = vmatpush1.msra.mxu0 %v55
    %178 = vmatprep.subr.mxu0 0.0
    %179 = vmatpush1.msra.mxu0 %v54
    %180 = vmatprep.subr.mxu0 0.0
    %181 = vmatpush1.msra.mxu0 %v53
    %182 = vmatprep.subr.mxu0 0.0
    %183 = vmatpush1.msra.mxu0 %v52
    %184 = vmatprep.subr.mxu0 0.0
    %185 = vmatpush1.msra.mxu0 %v51
    %186 = vmatprep.subr.mxu0 0.0
    %187 = vmatpush1.msra.mxu0 %v50
    %188 = vmatprep.subr.mxu0 0.0
    %189 = vmatpush1.msra.mxu0 %v49
    %190 = vmatprep.subr.mxu0 0.0
    %191 = vmatpush1.msra.mxu0 %v48
    %192 = vmatprep.subr.mxu0 0.0
    %193 = vmatpush2.msra.mxu0 %v79
    %194 = vmatprep.subr.mxu0 0.0
    %195 = vmatpush2.msra.mxu0 %v78
    %196 = vmatprep.subr.mxu0 0.0
    %197 = vmatpush2.msra.mxu0 %v77
    %198 = vmatprep.subr.mxu0 0.0
    %199 = vmatpush2.msra.mxu0 %v76
    %200 = vmatprep.subr.mxu0 0.0
    %201 = vmatpush2.msra.mxu0 %v75
    %202 = vmatprep.subr.mxu0 0.0
    %203 = vmatpush2.msra.mxu0 %v74
    %204 = vmatprep.subr.mxu0 0.0
    %205 = vmatpush2.msra.mxu0 %v73
    %206 = vmatprep.subr.mxu0 0.0
    %207 = vmatpush2.msra.mxu0 %v72
    %208 = vmatprep.subr.mxu0 0.0
    %209 = vmatpush2.msra.mxu0 %v71
    %210 = vmatprep.subr.mxu0 0.0
    %211 = vmatpush2.msra.mxu0 %v70
    %212 = vmatprep.subr.mxu0 0.0
    %213 = vmatpush2.msra.mxu0 %v69
    %214 = vmatprep.subr.mxu0 0.0
    %215 = vmatpush2.msra.mxu0 %v68
    %216 = vmatprep.subr.mxu0 0.0
    %217 = vmatpush2.msra.mxu0 %v67
    %218 = vmatprep.subr.mxu0 0.0
    %219 = vmatpush2.msra.mxu0 %v66
    %220 = vmatprep.subr.mxu0 0.0
    %221 = vmatpush2.msra.mxu0 %v65
    %222 = vmatprep.subr.mxu0 0.0
    %223 = vmatpush2.msra.mxu0 %v64
    %224 = vmatprep.mubr.f32.mxu0 %v35
    %225 = vmatmul.mubr.f32.gmra.mxu0 %v34
    %v226 = vpop.f32.mrf.mxu0
    %v227 = vadd.f32 %v151, %v226
    %v228 = vpop.f32.mrf.mxu0
    %229 = vmatprep.mubr.f32.mxu0 %v42
    %230 = vmatmul.mubr.f32.gmra.mxu0 %v41
    %v231 = vpop.f32.mrf.mxu0
    %v232 = vadd.f32 %v151, %v231
    %v233 = vpop.f32.mrf.mxu0
    %234 = vdwg.mxu0
    %235 = vmatprep.subr.mxu0 0.0
    %236 = vmatpush1.msra.mxu0 %v95
    %237 = vmatprep.subr.mxu0 0.0
    %238 = vmatpush1.msra.mxu0 %v94
    %239 = vmatprep.subr.mxu0 0.0
    %240 = vmatpush1.msra.mxu0 %v93
    %241 = vmatprep.subr.mxu0 0.0
    %242 = vmatpush1.msra.mxu0 %v92
    %243 = vmatprep.subr.mxu0 0.0
    %244 = vmatpush1.msra.mxu0 %v91
    %245 = vmatprep.subr.mxu0 0.0
    %246 = vmatpush1.msra.mxu0 %v90
    %247 = vmatprep.subr.mxu0 0.0
    %248 = vmatpush1.msra.mxu0 %v89
    %249 = vmatprep.subr.mxu0 0.0
    %250 = vmatpush1.msra.mxu0 %v88
    %251 = vmatprep.subr.mxu0 0.0
    %252 = vmatpush1.msra.mxu0 %v87
    %253 = vmatprep.subr.mxu0 0.0
    %254 = vmatpush1.msra.mxu0 %v86
    %255 = vmatprep.subr.mxu0 0.0
    %256 = vmatpush1.msra.mxu0 %v85
    %257 = vmatprep.subr.mxu0 0.0
    %258 = vmatpush1.msra.mxu0 %v84
    %259 = vmatprep.subr.mxu0 0.0
    %260 = vmatpush1.msra.mxu0 %v83
    %261 = vmatprep.subr.mxu0 0.0
    %262 = vmatpush1.msra.mxu0 %v82
    %263 = vmatprep.subr.mxu0 0.0
    %264 = vmatpush1.msra.mxu0 %v81
    %265 = vmatprep.subr.mxu0 0.0
    %266 = vmatpush1.msra.mxu0 %v80
    %267 = vmatprep.subr.mxu0 0.0
    %268 = vmatpush2.msra.mxu0 %v111
    %269 = vmatprep.subr.mxu0 0.0
    %270 = vmatpush2.msra.mxu0 %v110
    %271 = vmatprep.subr.mxu0 0.0
    %272 = vmatpush2.msra.mxu0 %v109
    %273 = vmatprep.subr.mxu0 0.0
    %274 = vmatpush2.msra.mxu0 %v108
    %275 = vmatprep.subr.mxu0 0.0
    %276 = vmatpush2.msra.mxu0 %v107
    %277 = vmatprep.subr.mxu0 0.0
    %278 = vmatpush2.msra.mxu0 %v106
    %279 = vmatprep.subr.mxu0 0.0
    %280 = vmatpush2.msra.mxu0 %v105
    %281 = vmatprep.subr.mxu0 0.0
    %282 = vmatpush2.msra.mxu0 %v104
    %283 = vmatprep.subr.mxu0 0.0
    %284 = vmatpush2.msra.mxu0 %v103
    %285 = vmatprep.subr.mxu0 0.0
    %286 = vmatpush2.msra.mxu0 %v102
    %287 = vmatprep.subr.mxu0 0.0
    %288 = vmatpush2.msra.mxu0 %v101
    %289 = vmatprep.subr.mxu0 0.0
    %290 = vmatpush2.msra.mxu0 %v100
    %291 = vmatprep.subr.mxu0 0.0
    %292 = vmatpush2.msra.mxu0 %v99
    %293 = vmatprep.subr.mxu0 0.0
    %294 = vmatpush2.msra.mxu0 %v98
    %295 = vmatprep.subr.mxu0 0.0
    %296 = vmatpush2.msra.mxu0 %v97
    %297 = vmatprep.subr.mxu0 0.0
    %298 = vmatpush2.msra.mxu0 %v96
    %299 = vmatprep.mubr.f32.mxu0 %v37
    %300 = vmatmul.mubr.f32.gmra.mxu0 %v36
    %v301 = vpop.f32.mrf.mxu0
    %v302 = vadd.f32 %v227, %v301
    %v303 = vpop.f32.mrf.mxu0
    %304 = vmatprep.mubr.f32.mxu0 %v44
    %305 = vmatmul.mubr.f32.gmra.mxu0 %v43
    %v306 = vpop.f32.mrf.mxu0
    %v307 = vadd.f32 %v232, %v306
    %v308 = vpop.f32.mrf.mxu0
    %309 = vdwg.mxu0
    %310 = vmatprep.subr.mxu0 0.0
    %311 = vmatpush1.msra.mxu0 %v127
    %312 = vmatprep.subr.mxu0 0.0
    %313 = vmatpush1.msra.mxu0 %v126
    %314 = vmatprep.subr.mxu0 0.0
    %315 = vmatpush1.msra.mxu0 %v125
    %316 = vmatprep.subr.mxu0 0.0
    %317 = vmatpush1.msra.mxu0 %v124
    %318 = vmatprep.subr.mxu0 0.0
    %319 = vmatpush1.msra.mxu0 %v123
    %320 = vmatprep.subr.mxu0 0.0
    %321 = vmatpush1.msra.mxu0 %v122
    %322 = vmatprep.subr.mxu0 0.0
    %323 = vmatpush1.msra.mxu0 %v121
    %324 = vmatprep.subr.mxu0 0.0
    %325 = vmatpush1.msra.mxu0 %v120
    %326 = vmatprep.subr.mxu0 0.0
    %327 = vmatpush1.msra.mxu0 %v119
    %328 = vmatprep.subr.mxu0 0.0
    %329 = vmatpush1.msra.mxu0 %v118
    %330 = vmatprep.subr.mxu0 0.0
    %331 = vmatpush1.msra.mxu0 %v117
    %332 = vmatprep.subr.mxu0 0.0
    %333 = vmatpush1.msra.mxu0 %v116
    %334 = vmatprep.subr.mxu0 0.0
    %335 = vmatpush1.msra.mxu0 %v115
    %336 = vmatprep.subr.mxu0 0.0
    %337 = vmatpush1.msra.mxu0 %v114
    %338 = vmatprep.subr.mxu0 0.0
    %339 = vmatpush1.msra.mxu0 %v113
    %340 = vmatprep.subr.mxu0 0.0
    %341 = vmatpush1.msra.mxu0 %v112
    %342 = vmatprep.subr.mxu0 0.0
    %343 = vmatpush2.msra.mxu0 %v143
    %344 = vmatprep.subr.mxu0 0.0
    %345 = vmatpush2.msra.mxu0 %v142
    %346 = vmatprep.subr.mxu0 0.0
    %347 = vmatpush2.msra.mxu0 %v141
    %348 = vmatprep.subr.mxu0 0.0
    %349 = vmatpush2.msra.mxu0 %v140
    %350 = vmatprep.subr.mxu0 0.0
    %351 = vmatpush2.msra.mxu0 %v139
    %352 = vmatprep.subr.mxu0 0.0
    %353 = vmatpush2.msra.mxu0 %v138
    %354 = vmatprep.subr.mxu0 0.0
    %355 = vmatpush2.msra.mxu0 %v137
    %356 = vmatprep.subr.mxu0 0.0
    %357 = vmatpush2.msra.mxu0 %v136
    %358 = vmatprep.subr.mxu0 0.0
    %359 = vmatpush2.msra.mxu0 %v135
    %360 = vmatprep.subr.mxu0 0.0
    %361 = vmatpush2.msra.mxu0 %v134
    %362 = vmatprep.subr.mxu0 0.0
    %363 = vmatpush2.msra.mxu0 %v133
    %364 = vmatprep.subr.mxu0 0.0
    %365 = vmatpush2.msra.mxu0 %v132
    %366 = vmatprep.subr.mxu0 0.0
    %367 = vmatpush2.msra.mxu0 %v131
    %368 = vmatprep.subr.mxu0 0.0
    %369 = vmatpush2.msra.mxu0 %v130
    %370 = vmatprep.subr.mxu0 0.0
    %371 = vmatpush2.msra.mxu0 %v129
    %372 = vmatprep.subr.mxu0 0.0
    %373 = vmatpush2.msra.mxu0 %v128
    %374 = vmatprep.mubr.f32.mxu0 %v39
    %375 = vmatmul.mubr.f32.gmra.mxu0 %v38
    %v376 = vpop.f32.mrf.mxu0
    %v377 = vadd.f32 %v302, %v376
    %v378 = vpop.f32.mrf.mxu0
    %379 = vmatprep.mubr.f32.mxu0 %v46
    %380 = vmatmul.mubr.f32.gmra.mxu0 %v45
    %v381 = vpop.f32.mrf.mxu0
    %v382 = vadd.f32 %v307, %v381
    %v383 = vpop.f32.mrf.mxu0
    %384 = vdwg.mxu0
    %385 = vmatprep.subr.mxu0 0.0
    %386 = vmatpush1.msra.mxu0 0.0
    %387 = vmatprep.subr.mxu0 0.0
    %388 = vmatpush1.msra.mxu0 0.0
    %389 = vmatprep.subr.mxu0 0.0
    %390 = vmatpush1.msra.mxu0 0.0
    %391 = vmatprep.subr.mxu0 0.0
    %392 = vmatpush1.msra.mxu0 0.0
    %393 = vmatprep.subr.mxu0 0.0
    %394 = vmatpush1.msra.mxu0 0.0
    %395 = vmatprep.subr.mxu0 0.0
    %396 = vmatpush1.msra.mxu0 0.0
    %397 = vmatprep.subr.mxu0 0.0
    %398 = vmatpush1.msra.mxu0 0.0
    %399 = vmatprep.subr.mxu0 0.0
    %400 = vmatpush1.msra.mxu0 0.0
    %401 = vmatprep.subr.mxu0 0.0
    %402 = vmatpush1.msra.mxu0 0.0
    %403 = vmatprep.subr.mxu0 0.0
    %404 = vmatpush1.msra.mxu0 0.0
    %405 = vmatprep.subr.mxu0 0.0
    %406 = vmatpush1.msra.mxu0 0.0
    %407 = vmatprep.subr.mxu0 0.0
    %408 = vmatpush1.msra.mxu0 0.0
    %409 = vmatprep.subr.mxu0 0.0
    %410 = vmatpush1.msra.mxu0 0.0
    %411 = vmatprep.subr.mxu0 0.0
    %412 = vmatpush1.msra.mxu0 0.0
    %413 = vmatprep.subr.mxu0 0.0
    %414 = vmatpush1.msra.mxu0 %v145
    %415 = vmatprep.subr.mxu0 0.0
    %416 = vmatpush1.msra.mxu0 %v144
    %417 = vmatprep.subr.mxu0 0.0
    %418 = vmatpush2.msra.mxu0 0.0
    %419 = vmatprep.subr.mxu0 0.0
    %420 = vmatpush2.msra.mxu0 0.0
    %421 = vmatprep.subr.mxu0 0.0
    %422 = vmatpush2.msra.mxu0 0.0
    %423 = vmatprep.subr.mxu0 0.0
    %424 = vmatpush2.msra.mxu0 0.0
    %425 = vmatprep.subr.mxu0 0.0
    %426 = vmatpush2.msra.mxu0 0.0
    %427 = vmatprep.subr.mxu0 0.0
    %428 = vmatpush2.msra.mxu0 0.0
    %429 = vmatprep.subr.mxu0 0.0
    %430 = vmatpush2.msra.mxu0 0.0
    %431 = vmatprep.subr.mxu0 0.0
    %432 = vmatpush2.msra.mxu0 0.0
    %433 = vmatprep.subr.mxu0 0.0
    %434 = vmatpush2.msra.mxu0 0.0
    %435 = vmatprep.subr.mxu0 0.0
    %436 = vmatpush2.msra.mxu0 0.0
    %437 = vmatprep.subr.mxu0 0.0
    %438 = vmatpush2.msra.mxu0 0.0
    %439 = vmatprep.subr.mxu0 0.0
    %440 = vmatpush2.msra.mxu0 0.0
    %441 = vmatprep.subr.mxu0 0.0
    %442 = vmatpush2.msra.mxu0 0.0
    %443 = vmatprep.subr.mxu0 0.0
    %444 = vmatpush2.msra.mxu0 0.0
    %445 = vmatprep.subr.mxu0 0.0
    %446 = vmatpush2.msra.mxu0 0.0
    %447 = vmatprep.subr.mxu0 0.0
    %448 = vmatpush2.msra.mxu0 0.0
    %449 = vmatprep.mubr.f32.mxu0 0.0
    %450 = vmatmul.mubr.f32.gmra.mxu0 %v155
    %v451 = vpop.f32.mrf.mxu0
    %v452 = vadd.f32 %v377, %v451
    %v453 = vpop.f32.mrf.mxu0
    %454 = vmatprep.mubr.f32.mxu0 0.0
    %455 = vmatmul.mubr.f32.gmra.mxu0 %v158
    %v456 = vpop.f32.mrf.mxu0
    %v457 = vadd.f32 %v382, %v456
    %v458 = vpop.f32.mrf.mxu0
    %459 = vdwg.mxu0
    %v460 = vadd.f32 %v452, 0.0
    %v461 = vsub.f32 %v460, 1.0
    %vm462 = vcmp.gt.f32.partialorder %v461, 0.0
    %v463 = vsel %vm462, 1, 0
    %v464 = vcvt.s32.f32 %v463
    %v465 = vmul.f32 %v460, 0.5
    %v467 = vrot.slane %v452, 2
    %v469 = vadd.f32 %v465, %v467
    %v470 = vsub.f32 %v469, %v464
    %v471 = vsub.f32 %v470, 1.0
    %vm472 = vcmp.gt.f32.partialorder %v471, 0.0
    %v473 = vsel %vm472, 1, 0
    %v474 = vcvt.s32.f32 %v473
    %v475 = vmul.f32 %v470, 0.5
    %v476 = vrot.slane %v452, 4
    %v478 = vadd.f32 %v475, %v476
    %v479 = vsub.f32 %v478, %v474
    %v480 = vsub.f32 %v479, 1.0
    %vm481 = vcmp.gt.f32.partialorder %v480, 0.0
    %v482 = vsel %vm481, 1, 0
    %v483 = vcvt.s32.f32 %v482
    %v484 = vmul.f32 %v479, 0.5
    %v485 = vrot.slane %v452, 6
    %v487 = vadd.f32 %v484, %v485
    %v488 = vsub.f32 %v487, %v483
    %v489 = vsub.f32 %v488, 1.0
    %vm490 = vcmp.gt.f32.partialorder %v489, 0.0
    %v491 = vsel %vm490, 1, 0
    %v492 = vcvt.s32.f32 %v491
    %v493 = vmul.f32 %v488, 0.5
    %v494 = vadd.f32 %v493, %v457
    %v495 = vsub.f32 %v494, %v492
    %v496 = vsub.f32 %v495, 1.0
    %vm497 = vcmp.gt.f32.partialorder %v496, 0.0
    %v498 = vsel %vm497, 1, 0
    %v499 = vcvt.s32.f32 %v498
    %v500 = vmul.f32 %v495, 0.5
    %v502 = vrot.slane %v457, 2
    %v504 = vadd.f32 %v500, %v502
    %v505 = vsub.f32 %v504, %v499
    %v506 = vsub.f32 %v505, 1.0
    %vm507 = vcmp.gt.f32.partialorder %v506, 0.0
    %v508 = vsel %vm507, 1, 0
    %v509 = vcvt.s32.f32 %v508
    %v510 = vmul.f32 %v505, 0.5
    %v511 = vrot.slane %v457, 4
    %v513 = vadd.f32 %v510, %v511
    %v514 = vsub.f32 %v513, %v509
    %v515 = vsub.f32 %v514, 1.0
    %vm516 = vcmp.gt.f32.partialorder %v515, 0.0
    %v517 = vsel %vm516, 1, 0
    %v518 = vcvt.s32.f32 %v517
    %v519 = vmul.f32 %v514, 0.5
    %v520 = vrot.slane %v457, 6
    %v522 = vadd.f32 %v519, %v520
    %v523 = vsub.f32 %v522, %v518
    %v524 = vsub.f32 %v523, 1.0
    %vm525 = vcmp.gt.f32.partialorder %v524, 0.0
    %v526 = vsel %vm525, 1, 0
    %v527 = vcvt.s32.f32 %v526
    %v529 = vrot.slane %v474, 6
    %v532 = vrot.slane %v483, 4
    %v535 = vrot.slane %v492, 2
    %v538 = vrot.slane %v509, 6
    %v541 = vrot.slane %v518, 4
    %v544 = vrot.slane %v527, 2
    %vm546 = vcmask 1041408
    %v547 = vsel %vm546, %v464, %v529
    %vm548 = vcmask 1043456
    %v549 = vsel %vm548, %v547, %v532
    %vm550 = vcmask 1045504
    %v551 = vsel %vm550, %v549, %v535
    %v552 = vsel %vm546, %v499, %v538
    %v553 = vsel %vm548, %v552, %v541
    %v554 = vsel %vm550, %v553, %v544
    %v555 = vld [vmem:[%s3] sm:$0xff]
    %v556 = vld [vmem:[%s3 + $0x8] sm:$0xff]
    %v557 = vld [vmem:[%s3 + $0x10] sm:$0xff]
    %v558 = vld [vmem:[%s3 + $0x18] sm:$0xff]
    %v559 = vld [vmem:[%s3 + $0x20] sm:$0xff]
    %v560 = vld [vmem:[%s3 + $0x28] sm:$0xff]
    %v561 = vld [vmem:[%s3 + $0x30] sm:$0xff]
    %v562 = vld [vmem:[%s3 + $0x38] sm:$0xff]
    %v563 = vld [vmem:[%s3 + $0x40] sm:$0xff]
    %v564 = vld [vmem:[%s3 + $0x48] sm:$0xff]
    %v565 = vld [vmem:[%s3 + $0x50] sm:$0xff]
    %v566 = vld [vmem:[%s3 + $0x58] sm:$0xff]
    %v567 = vld [vmem:[%s3 + $0x60] sm:$0xff]
    %v568 = vld [vmem:[%s3 + $0x68] sm:$0xff]
    %v569 = vld [vmem:[%s3 + $0x70] sm:$0xff]
    %v570 = vld [vmem:[%s3 + $0x78] sm:$0xff]
    %v571 = vld [vmem:[%s4] sm:$0x1]
    %v573 = vlaneseq
    %v574 = vshrl.u32 %v573, 7
    %v575 = vsub.s32 0, %v574
    %v576 = vrot.slane %v571, %v575
    %578 = vmatprep.subr.mxu0 0.0
    %579 = vmatpush1.msra.mxu0 %v570
    %580 = vmatprep.subr.mxu0 0.0
    %581 = vmatpush1.msra.mxu0 %v569
    %582 = vmatprep.subr.mxu0 0.0
    %583 = vmatpush1.msra.mxu0 %v568
    %584 = vmatprep.subr.mxu0 0.0
    %585 = vmatpush1.msra.mxu0 %v567
    %586 = vmatprep.subr.mxu0 0.0
    %587 = vmatpush1.msra.mxu0 %v566
    %588 = vmatprep.subr.mxu0 0.0
    %589 = vmatpush1.msra.mxu0 %v565
    %590 = vmatprep.subr.mxu0 0.0
    %591 = vmatpush1.msra.mxu0 %v564
    %592 = vmatprep.subr.mxu0 0.0
    %593 = vmatpush1.msra.mxu0 %v563
    %594 = vmatprep.subr.mxu0 0.0
    %595 = vmatpush1.msra.mxu0 %v562
    %596 = vmatprep.subr.mxu0 0.0
    %597 = vmatpush1.msra.mxu0 %v561
    %598 = vmatprep.subr.mxu0 0.0
    %599 = vmatpush1.msra.mxu0 %v560
    %600 = vmatprep.subr.mxu0 0.0
    %601 = vmatpush1.msra.mxu0 %v559
    %602 = vmatprep.subr.mxu0 0.0
    %603 = vmatpush1.msra.mxu0 %v558
    %604 = vmatprep.subr.mxu0 0.0
    %605 = vmatpush1.msra.mxu0 %v557
    %606 = vmatprep.subr.mxu0 0.0
    %607 = vmatpush1.msra.mxu0 %v556
    %608 = vmatprep.subr.mxu0 0.0
    %609 = vmatpush1.msra.mxu0 %v555
    %610 = vmatprep.subr.mxu0 0.0
    %611 = vmatpush2.msra.mxu0 0.0
    %612 = vmatprep.subr.mxu0 0.0
    %613 = vmatpush2.msra.mxu0 0.0
    %614 = vmatprep.subr.mxu0 0.0
    %615 = vmatpush2.msra.mxu0 0.0
    %616 = vmatprep.subr.mxu0 0.0
    %617 = vmatpush2.msra.mxu0 0.0
    %618 = vmatprep.subr.mxu0 0.0
    %619 = vmatpush2.msra.mxu0 0.0
    %620 = vmatprep.subr.mxu0 0.0
    %621 = vmatpush2.msra.mxu0 0.0
    %622 = vmatprep.subr.mxu0 0.0
    %623 = vmatpush2.msra.mxu0 0.0
    %624 = vmatprep.subr.mxu0 0.0
    %625 = vmatpush2.msra.mxu0 0.0
    %626 = vmatprep.subr.mxu0 0.0
    %627 = vmatpush2.msra.mxu0 0.0
    %628 = vmatprep.subr.mxu0 0.0
    %629 = vmatpush2.msra.mxu0 0.0
    %630 = vmatprep.subr.mxu0 0.0
    %631 = vmatpush2.msra.mxu0 0.0
    %632 = vmatprep.subr.mxu0 0.0
    %633 = vmatpush2.msra.mxu0 0.0
    %634 = vmatprep.subr.mxu0 0.0
    %635 = vmatpush2.msra.mxu0 0.0
    %636 = vmatprep.subr.mxu0 0.0
    %637 = vmatpush2.msra.mxu0 0.0
    %638 = vmatprep.subr.mxu0 0.0
    %639 = vmatpush2.msra.mxu0 0.0
    %640 = vmatprep.subr.mxu0 0.0
    %641 = vmatpush2.msra.mxu0 0.0
    %642 = vmatprep.mubr.f32.mxu0 0.0
    %643 = vmatmul.mubr.f32.gmra.mxu0 %v551
    %v644 = vpop.f32.mrf.mxu0
    %v645 = vadd.f32 %v576, %v644
    %v646 = vpop.f32.mrf.mxu0
    %647 = vmatprep.mubr.f32.mxu0 0.0
    %648 = vmatmul.mubr.f32.gmra.mxu0 %v554
    %v649 = vpop.f32.mrf.mxu0
    %v650 = vadd.f32 %v576, %v649
    %v651 = vpop.f32.mrf.mxu0
    %652 = vdwg.mxu0
    %v653 = vadd.f32 %v645, 0.0
    %v654 = vsub.f32 %v653, 1.0
    %vm655 = vcmp.gt.f32.partialorder %v654, 0.0
    %v656 = vsel %vm655, 1, 0
    %v657 = vcvt.s32.f32 %v656
    %v658 = vadd.f32 %v657, 0.0
    %v659 = vmul.f32 %v653, 0.5
    %v661 = vrot.slane %v645, 2
    %v663 = vadd.f32 %v659, %v661
    %v664 = vsub.f32 %v663, %v657
    %v665 = vsub.f32 %v664, 1.0
    %vm666 = vcmp.gt.f32.partialorder %v665, 0.0
    %v667 = vsel %vm666, 1, 0
    %v668 = vcvt.s32.f32 %v667
    %v669 = vadd.f32 %v658, %v668
    %v670 = vmul.f32 %v664, 0.5
    %v671 = vrot.slane %v645, 4
    %v673 = vadd.f32 %v670, %v671
    %v674 = vsub.f32 %v673, %v668
    %v675 = vsub.f32 %v674, 1.0
    %vm676 = vcmp.gt.f32.partialorder %v675, 0.0
    %v677 = vsel %vm676, 1, 0
    %v678 = vcvt.s32.f32 %v677
    %v679 = vadd.f32 %v669, %v678
    %v680 = vmul.f32 %v674, 0.5
    %v681 = vrot.slane %v645, 6
    %v683 = vadd.f32 %v680, %v681
    %v684 = vsub.f32 %v683, %v678
    %v685 = vsub.f32 %v684, 1.0
    %vm686 = vcmp.gt.f32.partialorder %v685, 0.0
    %v687 = vsel %vm686, 1, 0
    %v688 = vcvt.s32.f32 %v687
    %v689 = vadd.f32 %v679, %v688
    %v690 = vmul.f32 %v684, 0.5
    %v691 = vadd.f32 %v690, %v650
    %v692 = vsub.f32 %v691, %v688
    %v693 = vsub.f32 %v692, 1.0
    %vm694 = vcmp.gt.f32.partialorder %v693, 0.0
    %v695 = vsel %vm694, 1, 0
    %v696 = vcvt.s32.f32 %v695
    %v697 = vadd.f32 %v689, %v696
    %v698 = vmul.f32 %v692, 0.5
    %v700 = vrot.slane %v650, 2
    %v702 = vadd.f32 %v698, %v700
    %v703 = vsub.f32 %v702, %v696
    %v704 = vsub.f32 %v703, 1.0
    %vm705 = vcmp.gt.f32.partialorder %v704, 0.0
    %v706 = vsel %vm705, 1, 0
    %v707 = vcvt.s32.f32 %v706
    %v708 = vadd.f32 %v697, %v707
    %v709 = vmul.f32 %v703, 0.5
    %v710 = vrot.slane %v650, 4
    %v712 = vadd.f32 %v709, %v710
    %v713 = vsub.f32 %v712, %v707
    %v714 = vsub.f32 %v713, 1.0
    %vm715 = vcmp.gt.f32.partialorder %v714, 0.0
    %v716 = vsel %vm715, 1, 0
    %v717 = vcvt.s32.f32 %v716
    %v718 = vadd.f32 %v708, %v717
    %v719 = vmul.f32 %v713, 0.5
    %v720 = vrot.slane %v650, 6
    %v722 = vadd.f32 %v719, %v720
    %v723 = vsub.f32 %v722, %v717
    %v724 = vsub.f32 %v723, 1.0
    %vm725 = vcmp.gt.f32.partialorder %v724, 0.0
    %v726 = vsel %vm725, 1, 0
    %v727 = vcvt.s32.f32 %v726
    %v728 = vadd.f32 %v718, %v727
    %729 = vst [vmem:[%s5] sm:$0x3] %v728
    // Predicated region
    $region26: #{leaky_two_layer_forward.1} parent=1 // pred_check
      _
    $region27: #{leaky_two_layer_forward.1} parent=1 // pred_check_branch
      %731 = sbr.rel (0) target = $region29
    $region28: #{leaky_two_layer_forward.1} parent=1 // pred_region
      _
    $region29: #{leaky_two_layer_forward.1} parent=1 // pred_fallthru
      _
    // Predicated region
    $region30: #{leaky_two_layer_forward.1} parent=1 // pred_check
      _
    $region31: #{leaky_two_layer_forward.1} parent=1 // pred_check_branch
      %733 = sbr.rel (0) target = $region33
    $region32: #{leaky_two_layer_forward.1} parent=1 // pred_region
      _
    $region33: #{leaky_two_layer_forward.1} parent=1 // pred_fallthru
      _
    %734 = vsyncpa [#allocation3], 1

</llo_original>
